<compile_context>
chip_gen: v5e
topology: v5e:2x2
jax: 0.10.0
libtpu: 0.0.40
codegen_flags: <defaults>
</compile_context>

<pallas_src>
import functools

import jax
import jax.numpy as jnp
from jax.experimental import pallas as pl
from jax.experimental.pallas import tpu as pltpu


def _round_up(x, m):
    return (x + m - 1) // m * m


def _log_sigmoid(x):
    # Stable log(sigmoid(x)) = min(x, 0) - log(1 + exp(-|x|));
    # identical to torch.log(torch.sigmoid(x)) without -inf underflow.
    return jnp.minimum(x, 0.0) - jnp.log(1.0 + jnp.exp(-jnp.abs(x)))


def _nce_loss_kernel(ctx_ref, tgt_ref, noise_ref, out_ref, *,
                     n_valid, tn, mask_cols):
    j = pl.program_id(1)
    n_steps = pl.num_programs(1)

    @pl.when(j == 0)
    def _init():
        out_ref[...] = jnp.zeros_like(out_ref)

    c = ctx_ref[...]       # [tb, D], native dtype (MXU lhs)
    n = noise_ref[...]     # [tn, D], native dtype (MXU rhs)

    # context @ noise^T as a contraction over D -- no transposed copy of noise.
    cn = jax.lax.dot_general(
        c, n,
        dimension_numbers=(((1,), (1,)), ((), ())),
        preferred_element_type=jnp.float32,
    )                      # [tb, tn] f32

    ls = _log_sigmoid(-cn)               # [tb, tn]
    if mask_cols:
        col = jax.lax.broadcasted_iota(jnp.int32, ls.shape, 1) + j * tn
        ls = jnp.where(col < n_valid, ls, 0.0)

    # Accumulate raw per-row sums; all scaling deferred to the finalize branch.
    out_ref[...] += jnp.sum(ls, axis=1, keepdims=True)   # [tb, 1]

    @pl.when(j == n_steps - 1)
    def _finalize():
        c32 = c.astype(jnp.float32)
        t32 = tgt_ref[...].astype(jnp.float32)
        ct = jnp.sum(c32 * t32, axis=1, keepdims=True)    # [tb, 1]
        out_ref[...] = _log_sigmoid(ct) + out_ref[...] * (1.0 / n_valid)


def nce_loss(context_embeddings, target_embeddings, noise_embeddings, *,
             tb=256, tn=512):
    B, D = context_embeddings.shape
    N, Dn = noise_embeddings.shape
    assert Dn == D, "embedding dims must match"

    # Tile sizes: clamp to (8-rounded) problem size for tiny shapes.
    tb = min(tb, _round_up(B, 8))
    tn = min(tn, _round_up(N, 8))
    b_pad = _round_up(B, tb)
    n_pad = _round_up(N, tn)

    ctx, tgt, noise = context_embeddings, target_embeddings, noise_embeddings
    if b_pad != B:
        ctx = jnp.pad(ctx, ((0, b_pad - B), (0, 0)))
        tgt = jnp.pad(tgt, ((0, b_pad - B), (0, 0)))
    if n_pad != N:
        noise = jnp.pad(noise, ((0, n_pad - N), (0, 0)))

    grid = (b_pad // tb, n_pad // tn)

    kernel = functools.partial(
        _nce_loss_kernel, n_valid=N, tn=tn, mask_cols=(n_pad != N))

    itemsize = jnp.dtype(context_embeddings.dtype).itemsize
    cost = pl.CostEstimate(
        flops=2 * B * N * D + 2 * B * D + 6 * B * N,
        transcendentals=2 * (B * N + B),
        bytes_accessed=itemsize * (2 * B * D + N * D) + 4 * B,
    )

    per_row = pl.pallas_call(
        kernel,
        out_shape=jax.ShapeDtypeStruct((b_pad, 1), jnp.float32),
        grid_spec=pltpu.PrefetchScalarGridSpec(
            num_scalar_prefetch=0,
            grid=grid,
            in_specs=[
                pl.BlockSpec((tb, D), lambda i, j: (i, 0)),   # context
                pl.BlockSpec((tb, D), lambda i, j: (i, 0)),   # target
                pl.BlockSpec((tn, D), lambda i, j: (j, 0)),   # noise
            ],
            out_specs=pl.BlockSpec((tb, 1), lambda i, j: (i, 0)),
        ),
        compiler_params=pltpu.CompilerParams(
            dimension_semantics=("parallel", "arbitrary"),
            vmem_limit_bytes=32 * 1024 * 1024,
        ),
        cost_estimate=cost,
    )(ctx, tgt, noise)

    # Final tiny reduction (1/B mean over valid rows) in plain JAX.
    return jnp.mean(per_row[:B, 0])


def nce_loss_ref(context_embeddings, target_embeddings, noise_embeddings):
    # Pure-JAX reference mirroring the PyTorch module.
    ct = jnp.sum(context_embeddings * target_embeddings, axis=1)
    cn = context_embeddings @ noise_embeddings.T
    loss_vec = jnp.log(jax.nn.sigmoid(ct)) + jnp.mean(
        jnp.log(jax.nn.sigmoid(-cn)), axis=1
    )
    return jnp.mean(loss_vec)


if __name__ == "__main__":
    B, D, N = 8, 32, 16  # batch, embedding dim, number of noise samples

    key = jax.random.PRNGKey(0)
    k_ctx, k_tgt, k_noise = jax.random.split(key, 3)
    context_embeddings = jax.random.normal(k_ctx, (B, D), dtype=jnp.float32)
    target_embeddings = jax.random.normal(k_tgt, (B, D), dtype=jnp.float32)
    noise_embeddings = jax.random.normal(k_noise, (N, D), dtype=jnp.float32)

    loss = nce_loss(context_embeddings, target_embeddings, noise_embeddings)
    loss = jax.block_until_ready(loss)

    ref = nce_loss_ref(context_embeddings, target_embeddings, noise_embeddings)
    assert jnp.allclose(loss, ref, rtol=1e-5, atol=1e-5), (loss, ref)

    print("KERNEL_OK")
</pallas_src>

<mosaic_0001>
module attributes {stable_mosaic.version = 11 : i64} {
  func.func @_nce_loss_kernel(%arg0: i32, %arg1: i32, %arg2: memref<8x32xf32, #tpu.memory_space<vmem>>, %arg3: memref<8x32xf32, #tpu.memory_space<vmem>>, %arg4: memref<16x32xf32, #tpu.memory_space<vmem>>, %arg5: memref<8x1xf32, #tpu.memory_space<vmem>>) attributes {dimension_semantics = [#tpu.dimension_semantics<parallel>, #tpu.dimension_semantics<arbitrary>], iteration_bounds = array<i64: 1, 1>, scalar_prefetch = 0 : i64, scratch_operands = 0 : i64, tpu.core_type = #tpu.core_type<tc>, window_params = [{transform_indices = @transform_0, window_bounds = array<i64: 8, 32>}, {transform_indices = @transform_1, window_bounds = array<i64: 8, 32>}, {transform_indices = @transform_2, window_bounds = array<i64: 16, 32>}, {transform_indices = @transform_3, window_bounds = array<i64: 8, 1>}]} {
    %c0_i32 = arith.constant 0 : i32
    %0 = arith.cmpi eq, %arg1, %c0_i32 : i32
    %1 = arith.extui %0 : i1 to i32
    %c0_i32_0 = arith.constant 0 : i32
    %2 = arith.cmpi ne, %1, %c0_i32_0 : i32
    scf.if %2 {
      %cst_15 = arith.constant 0.000000e+00 : f32
      %26 = vector.broadcast %cst_15 : f32 to vector<8x1xf32>
      %c0_16 = arith.constant 0 : index
      %c0_17 = arith.constant 0 : index
      %27 = vector.load %arg5[%c0_16, %c0_17] : memref<8x1xf32, #tpu.memory_space<vmem>>, vector<8x1xf32>
      tpu.vector_store %arg5[%c0_16, %c0_17], %26 {strides = array<i32>} : memref<8x1xf32, #tpu.memory_space<vmem>>, vector<8x1xf32>,
    } else {
    }
    %c0 = arith.constant 0 : index
    %c0_1 = arith.constant 0 : index
    %3 = vector.load %arg2[%c0, %c0_1] : memref<8x32xf32, #tpu.memory_space<vmem>>, vector<8x32xf32>
    %c0_2 = arith.constant 0 : index
    %c0_3 = arith.constant 0 : index
    %4 = vector.load %arg4[%c0_2, %c0_3] : memref<16x32xf32, #tpu.memory_space<vmem>>, vector<16x32xf32>
    %cst = arith.constant dense<0.000000e+00> : vector<8x16xf32>
    %5 = tpu.matmul %3, %4, %cst {dimension_numbers = #tpu.dot_dimension_numbers<[1], [1], [0], [0], [0, 0, 1, 0], [], []>} : vector<8x32xf32>, vector<16x32xf32>, vector<8x16xf32> -> vector<8x16xf32>
    %cst_4 = arith.constant 0.000000e+00 : f32
    %6 = vector.broadcast %cst_4 : f32 to vector<8x16xf32>
    %7 = arith.subf %6, %5 : vector<8x16xf32>
    %cst_5 = arith.constant 0.000000e+00 : f32
    %8 = vector.broadcast %cst_5 : f32 to vector<8x16xf32>
    %9 = arith.minimumf %7, %8 : vector<8x16xf32>
    %10 = math.absf %7 : vector<8x16xf32>
    %cst_6 = arith.constant 0.000000e+00 : f32
    %11 = vector.broadcast %cst_6 : f32 to vector<8x16xf32>
    %12 = arith.subf %11, %10 : vector<8x16xf32>
    %13 = math.exp %12 : vector<8x16xf32>
    %cst_7 = arith.constant 1.000000e+00 : f32
    %14 = vector.broadcast %cst_7 : f32 to vector<8x16xf32>
    %15 = arith.addf %14, %13 : vector<8x16xf32>
    %16 = math.log %15 : vector<8x16xf32>
    %17 = arith.subf %9, %16 : vector<8x16xf32>
    %c0_8 = arith.constant 0 : index
    %c0_9 = arith.constant 0 : index
    %18 = vector.load %arg5[%c0_8, %c0_9] : memref<8x1xf32, #tpu.memory_space<vmem>>, vector<8x1xf32>
    %cst_10 = arith.constant dense<0.000000e+00> : vector<8xf32>
    %19 = vector.multi_reduction <add>, %17, %cst_10 [1] : vector<8x16xf32> to vector<8xf32>
    %20 = vector.shape_cast %19 : vector<8xf32> to vector<8x1xf32>
    %21 = arith.addf %18, %20 : vector<8x1xf32>
    %c0_11 = arith.constant 0 : index
    %c0_12 = arith.constant 0 : index
    %22 = vector.load %arg5[%c0_11, %c0_12] : memref<8x1xf32, #tpu.memory_space<vmem>>, vector<8x1xf32>
    tpu.vector_store %arg5[%c0_11, %c0_12], %21 {strides = array<i32>} : memref<8x1xf32, #tpu.memory_space<vmem>>, vector<8x1xf32>,
    %c0_i32_13 = arith.constant 0 : i32
    %23 = arith.cmpi eq, %arg1, %c0_i32_13 : i32
    %24 = arith.extui %23 : i1 to i32
    %c0_i32_14 = arith.constant 0 : i32
    %25 = arith.cmpi ne, %24, %c0_i32_14 : i32
    scf.if %25 {
      %c0_15 = arith.constant 0 : index
      %c0_16 = arith.constant 0 : index
      %26 = vector.load %arg3[%c0_15, %c0_16] : memref<8x32xf32, #tpu.memory_space<vmem>>, vector<8x32xf32>
      %27 = arith.mulf %3, %26 : vector<8x32xf32>
      %cst_17 = arith.constant dense<0.000000e+00> : vector<8xf32>
      %28 = vector.multi_reduction <add>, %27, %cst_17 [1] : vector<8x32xf32> to vector<8xf32>
      %29 = vector.shape_cast %28 : vector<8xf32> to vector<8x1xf32>
      %cst_18 = arith.constant 0.000000e+00 : f32
      %30 = vector.broadcast %cst_18 : f32 to vector<8x1xf32>
      %31 = arith.minimumf %29, %30 : vector<8x1xf32>
      %32 = math.absf %29 : vector<8x1xf32>
      %cst_19 = arith.constant 0.000000e+00 : f32
      %33 = vector.broadcast %cst_19 : f32 to vector<8x1xf32>
      %34 = arith.subf %33, %32 : vector<8x1xf32>
      %35 = math.exp %34 : vector<8x1xf32>
      %cst_20 = arith.constant 1.000000e+00 : f32
      %36 = vector.broadcast %cst_20 : f32 to vector<8x1xf32>
      %37 = arith.addf %36, %35 : vector<8x1xf32>
      %38 = math.log %37 : vector<8x1xf32>
      %39 = arith.subf %31, %38 : vector<8x1xf32>
      %c0_21 = arith.constant 0 : index
      %c0_22 = arith.constant 0 : index
      %40 = vector.load %arg5[%c0_21, %c0_22] : memref<8x1xf32, #tpu.memory_space<vmem>>, vector<8x1xf32>
      %cst_23 = arith.constant 6.250000e-02 : f32
      %41 = vector.broadcast %cst_23 : f32 to vector<8x1xf32>
      %42 = arith.mulf %40, %41 : vector<8x1xf32>
      %43 = arith.addf %39, %42 : vector<8x1xf32>
      %c0_24 = arith.constant 0 : index
      %c0_25 = arith.constant 0 : index
      %44 = vector.load %arg5[%c0_24, %c0_25] : memref<8x1xf32, #tpu.memory_space<vmem>>, vector<8x1xf32>
      tpu.vector_store %arg5[%c0_24, %c0_25], %43 {strides = array<i32>} : memref<8x1xf32, #tpu.memory_space<vmem>>, vector<8x1xf32>,
    } else {
    }
    return
  }
  func.func @transform_0(%arg0: i32, %arg1: i32) -> (i32, i32) {
    %c0_i32 = arith.constant 0 : i32
    %c0_i32_0 = arith.constant 0 : i32
    return %arg0, %c0_i32 : i32, i32
  }
  func.func @transform_1(%arg0: i32, %arg1: i32) -> (i32, i32) {
    %c0_i32 = arith.constant 0 : i32
    %c0_i32_0 = arith.constant 0 : i32
    return %arg0, %c0_i32 : i32, i32
  }
  func.func @transform_2(%arg0: i32, %arg1: i32) -> (i32, i32) {
    %c0_i32 = arith.constant 0 : i32
    %c0_i32_0 = arith.constant 0 : i32
    return %arg1, %c0_i32 : i32, i32
  }
  func.func @transform_3(%arg0: i32, %arg1: i32) -> (i32, i32) {
    %c0_i32 = arith.constant 0 : i32
    %c0_i32_0 = arith.constant 0 : i32
    return %arg0, %c0_i32 : i32, i32
  }
}

</mosaic_0001>

<llo_original>
// kernel: tpu_custom_call.1
$region0: #{tpu_custom_call.1}
  #allocation0 [shape = 'u32[]', space=smem, size = 0x4, offset = 0x4, fixed_abs, tag = 'smem constant byte address 0x4 - core index']
  #allocation1 [shape = 'u32[72,128]{1,0:T(1,128)}', space=vmem, size = 0x9000, scoped, tag = 'internal scratch']
  %s0 = inlined_call_operand.hbm [shape: f32[8,32], index: 0, kind: input, shape index: {}]
  %s1 = inlined_call_operand.hbm [shape: f32[8,32], index: 1, kind: input, shape index: {}]
  %s2 = inlined_call_operand.hbm [shape: f32[16,32], index: 2, kind: input, shape index: {}]
  %s3 = inlined_call_operand.vmem [shape: f32[8,1], index: 3, kind: output, shape index: {}]
  %s4 = sld [smem:[#allocation0]]
  $region42: #{tpu_custom_call.1} parent=0
    _
  %s6 = ssub.s32 1, %s4
  %s7 = scalar_select 0, %s6, %s4
  $region1: #{tpu_custom_call.1} parent=0
    #allocation2 [shape = 'u8[4096]{0}', space=vmem, size = 0x1000, scoped, tag = 'input window, operand 0, single buffered']
    #allocation3 [shape = 's32[1]{0}', space=sflag, size = 0x4, scoped, tag = 'scoped memory for tpu_custom_call.1']
    #allocation4 [shape = 'u8[4096]{0}', space=vmem, size = 0x1000, scoped, tag = 'input window, operand 1, single buffered']
    #allocation5 [shape = 's32[1]{0}', space=sflag, size = 0x4, scoped, tag = 'scoped memory for tpu_custom_call.1']
    #allocation6 [shape = 'u8[8192]{0}', space=vmem, size = 0x2000, scoped, tag = 'input window, operand 2, single buffered']
    %8 = vsyncpa [#allocation3], 0
    %9 = vsyncpa [#allocation5], 0
    // Predicated region
    $region2: #{tpu_custom_call.1} parent=1 // pred_check
      _
    $region3: #{tpu_custom_call.1} parent=1 // pred_check_branch
      %11 = sbr.rel (0) target = $region5
    $region4: #{tpu_custom_call.1} parent=1 // pred_region
      %13 = vsyncadd [#allocation3], 0
      %s15 = sshll.u32 %s0, 4
      %s16 = int_to_ptr.hbm [resolvable:$true] %s15
      %s17 = sshll.u32 [#allocation2], 4
      %s18 = int_to_ptr.vmem [resolvable:$true] %s17
      %20 = dma.hbm_to_vmem [thread:$0]  %s16, 128, %s18, [#allocation3]
    $region5: #{tpu_custom_call.1} parent=1 // pred_fallthru
      _
    // Predicated region
    $region6: #{tpu_custom_call.1} parent=1 // pred_check
      _
    $region7: #{tpu_custom_call.1} parent=1 // pred_check_branch
      %22 = sbr.rel (0) target = $region9
    $region8: #{tpu_custom_call.1} parent=1 // pred_region
      %24 = vsyncadd [#allocation5], 0
      %s26 = sshll.u32 %s1, 4
      %s27 = int_to_ptr.hbm [resolvable:$true] %s26
      %s28 = sshll.u32 [#allocation4], 4
      %s29 = int_to_ptr.vmem [resolvable:$true] %s28
      %31 = dma.hbm_to_vmem [thread:$0]  %s27, 128, %s29, [#allocation5]
    $region9: #{tpu_custom_call.1} parent=1 // pred_fallthru
      _
    // Predicated region
    $region10: #{tpu_custom_call.1} parent=1 // pred_check
      _
    $region11: #{tpu_custom_call.1} parent=1 // pred_check_branch
      %33 = sbr.rel (0) target = $region13
    $region12: #{tpu_custom_call.1} parent=1 // pred_region
      %35 = vsyncadd [#allocation5], 0
      %s36 = sshll.u32 %s2, 4
      %s37 = int_to_ptr.hbm [resolvable:$true] %s36
      %s38 = sshll.u32 [#allocation6], 4
      %s39 = int_to_ptr.vmem [resolvable:$true] %s38
      %44 = dma.hbm_to_vmem [thread:$0]  %s37, 256, %s39, [#allocation5], 128, 128, 8
    $region13: #{tpu_custom_call.1} parent=1 // pred_fallthru
      _
    // Predicated region
    $region14: #{tpu_custom_call.1} parent=1 // pred_check
      _
    $region15: #{tpu_custom_call.1} parent=1 // pred_check_branch
      %46 = sbr.rel (0) target = $region17
    $region16: #{tpu_custom_call.1} parent=1 // pred_region
      %48 = dma.done [#allocation3], 128
    $region17: #{tpu_custom_call.1} parent=1 // pred_fallthru
      _
    // Predicated region
    $region18: #{tpu_custom_call.1} parent=1 // pred_check
      _
    $region19: #{tpu_custom_call.1} parent=1 // pred_check_branch
      %50 = sbr.rel (0) target = $region21
    $region20: #{tpu_custom_call.1} parent=1 // pred_region
      %52 = dma.done [#allocation5], 128
    $region21: #{tpu_custom_call.1} parent=1 // pred_fallthru
      _
    // Predicated region
    $region22: #{tpu_custom_call.1} parent=1 // pred_check
      _
    $region23: #{tpu_custom_call.1} parent=1 // pred_check_branch
      %54 = sbr.rel (0) target = $region25
    $region24: #{tpu_custom_call.1} parent=1 // pred_region
      %56 = dma.done [#allocation5], 256
    $region25: #{tpu_custom_call.1} parent=1 // pred_fallthru
      _
    %p57 = scmp.eq.s32.totalorder 0, 0
    // Predicated region
    $region26: #{tpu_custom_call.1} parent=1 // pred_check
      %p58 = pneg %p57
    $region27: #{tpu_custom_call.1} parent=1 // pred_check_branch
      %60 = sbr.rel (%p58) target = $region29
    $region28: #{tpu_custom_call.1} parent=1 // pred_region
      %vm61 = vcmask 7168
      %62 = vst.msk [vmem:[%s3] sm:$0xff] %vm61, 0.0
    $region29: #{tpu_custom_call.1} parent=1 // pred_fallthru
      _
    %v63 = vld [vmem:[#allocation2] sm:$0xff]
    %v64 = vld [vmem:[#allocation6] sm:$0xff]
    %v65 = vld [vmem:[#allocation6 + $0x8] sm:$0xff]
    %vm66 = vcmask 261120
    %v68 = vsel %vm66, %v63, 0
    %v71 = vsel %vm66, %v64, 0
    %v74 = vsel %vm66, %v65, 0
    %76 = vmatpush.xpose.msra.mxu0 0.0
    %77 = vmatpush.xpose.msra.mxu0 0.0
    %78 = vmatpush.xpose.msra.mxu0 0.0
    %79 = vmatpush.xpose.msra.mxu0 0.0
    %80 = vmatpush.xpose.msra.mxu0 0.0
    %81 = vmatpush.xpose.msra.mxu0 0.0
    %82 = vmatpush.xpose.msra.mxu0 0.0
    %83 = vmatpush.xpose.msra.mxu0 0.0
    %84 = vmatpush.xpose.msra.mxu0 0.0
    %85 = vmatpush.xpose.msra.mxu0 0.0
    %86 = vmatpush.xpose.msra.mxu0 0.0
    %87 = vmatpush.xpose.msra.mxu0 0.0
    %88 = vmatpush.xpose.msra.mxu0 0.0
    %89 = vmatpush.xpose.msra.mxu0 0.0
    %90 = vmatpush.xpose.msra.mxu0 %v74
    %91 = vmatpush.xpose.msra.mxu0 %v71
    %92 = vmatmul.f32.gmra.mxu0 %v68
    %v93 = vpop.f32.mrf.mxu0
    %v94 = vadd.f32 0.0, %v93
    %95 = vdwg.mxu0
    %v96 = vsub.f32 0.0, %v94
    %v97 = vmin.f32 %v96, 0.0
    %v98 = vand.u32 2147483647, %v96
    %v99 = vsub.f32 0.0, %v98
    %v100 = vmul.f32 %v99, 1.442695
    %v101 = vpow.pop %v100
    %v102 = vadd.f32 %v101, 1.0
    %v103 = vlog2.pop %v102
    %v104 = vmul.f32 %v103, 0.6931472
    %v105 = vsub.f32 %v97, %v104
    %v106 = vld [vmem:[%s3] sm:$0xff]
    %vm107 = vcmask 130048
    %v108 = vsel %vm107, %v105, 0.0
    %109 = vadd.xlane.f32.xlu0 %v108
    %v110 = vpop.xlane.xlu0 %109
    %v111 = vadd.f32 %v106, %v110
    %vm112 = vcmask 7168
    %113 = vst.msk [vmem:[%s3] sm:$0xff] %vm112, %v111
    // Predicated region
    $region30: #{tpu_custom_call.1} parent=1 // pred_check
      %p114 = pneg %p57
    $region31: #{tpu_custom_call.1} parent=1 // pred_check_branch
      %116 = sbr.rel (%p114) target = $region33
    $region32: #{tpu_custom_call.1} parent=1 // pred_region
      %v117 = vld [vmem:[#allocation4] sm:$0xff]
      %v118 = vmul.f32 %v63, %v117
      %v119 = vsel %vm66, %v118, 0.0
      %120 = vadd.xlane.f32.xlu0 %v119
      %v121 = vpop.xlane.xlu0 %120
      %v122 = vmin.f32 %v121, 0.0
      %v123 = vand.u32 2147483647, %v121
      %v124 = vsub.f32 0.0, %v123
      %v125 = vmul.f32 %v124, 1.442695
      %v126 = vpow.pop %v125
      %v127 = vadd.f32 %v126, 1.0
      %v128 = vlog2.pop %v127
      %v129 = vmul.f32 %v128, 0.6931472
      %v130 = vsub.f32 %v122, %v129
      %v131 = vld [vmem:[%s3] sm:$0xff]
      %v132 = vmul.f32 %v131, 0.0625
      %v133 = vadd.f32 %v130, %v132
      %134 = vst.msk [vmem:[%s3] sm:$0xff] %vm112, %v133
    $region33: #{tpu_custom_call.1} parent=1 // pred_fallthru
      _
    // Predicated region
    $region34: #{tpu_custom_call.1} parent=1 // pred_check
      _
    $region35: #{tpu_custom_call.1} parent=1 // pred_check_branch
      %136 = sbr.rel (0) target = $region37
    $region36: #{tpu_custom_call.1} parent=1 // pred_region
      _
    $region37: #{tpu_custom_call.1} parent=1 // pred_fallthru
      _
    // Predicated region
    $region38: #{tpu_custom_call.1} parent=1 // pred_check
      _
    $region39: #{tpu_custom_call.1} parent=1 // pred_check_branch
      %138 = sbr.rel (0) target = $region41
    $region40: #{tpu_custom_call.1} parent=1 // pred_region
      _
    $region41: #{tpu_custom_call.1} parent=1 // pred_fallthru
      _
    %139 = vsyncpa [#allocation3], 1
    %140 = vsyncpa [#allocation5], 1

</llo_original>
